<compile_context>
chip_gen: v5e
topology: v5e:2x2
jax: 0.10.0
libtpu: 0.0.40
codegen_flags: <defaults>
</compile_context>

<pallas_src>
import functools

import jax
import jax.numpy as jnp
import numpy as np
from jax.experimental import pallas as pl
from jax.experimental.pallas import tpu as pltpu


# ----------------------------------------------------------------------------
# Kernel: transposed conv (kernel == stride) + skip add, one (b*d, H-tile) step
# ----------------------------------------------------------------------------
def _tconv_skip_add_kernel(x_ref, w_ref, s_ref, o_ref, *, k, compute_dtype):
    """
    x_ref : (1, TH, W, Cin)              input tile (channels-last)
    w_ref : (k^3, Cin, Cout)             per-offset weight matrices (resident)
    s_ref : (1, k, TH, k*W, k*Cout)      skip tile, blocked upsampled layout
    o_ref : (1, k, TH, k*W, k*Cout)      output tile, same layout
    """
    _, TH, W, Cin = x_ref.shape
    Cout = w_ref.shape[2]

    # (TH*W, Cin) rows for the MXU; cast once, reused for all k^3 offsets.
    x2 = x_ref[0].reshape(TH * W, Cin).astype(compute_dtype)

    # k is a small static Python int -> fully unrolled.
    for kd in range(k):
        for kh in range(k):
            for kw in range(k):
                off = (kd * k + kh) * k + kw
                y = jnp.dot(x2, w_ref[off],
                            preferred_element_type=jnp.float32)      # (TH*W, Cout) f32
                y = y.reshape(TH, W, Cout)
                idx = (0, kd, slice(None),
                       slice(kh * W, (kh + 1) * W),
                       slice(kw * Cout, (kw + 1) * Cout))
                # fused skip-add in f32, store directly in final (interleaved) layout
                o_ref[idx] = (y + s_ref[idx].astype(jnp.float32)).astype(o_ref.dtype)


def _pick_h_tile(H, W, Cout, k, itemsize=4, budget_bytes=24 * 1024 * 1024):
    """Largest divisor of H whose (skip + out) blocks, double-buffered, fit the budget."""
    per_row = 2 * 2 * k * (k * W) * (k * Cout) * itemsize   # skip+out, x2 buffering
    best = 1
    for th in range(1, H + 1):
        if H % th == 0 and th * per_row <= budget_bytes:
            best = th
    return best


# ----------------------------------------------------------------------------
# Wrapper: UnetrUpBlock.forward
# ----------------------------------------------------------------------------
def unetr_up_block_forward(inp_ncdhw, skip_ncdhw, w_tconv, *, k=2, h_tile=None,
                           compute_dtype=jnp.bfloat16):
    """
    inp_ncdhw : (B, Cin, D, H, W)      float32
    skip_ncdhw: (B, Cout, kD, kH, kW)  float32
    w_tconv   : (Cin, Cout, k, k, k)   ConvTranspose3d weight (bias=False)
    """
    B, Cin, D, H, W = inp_ncdhw.shape
    Cout = w_tconv.shape[1]
    assert w_tconv.shape == (Cin, Cout, k, k, k), w_tconv.shape
    Dk, Hk, Wk = D * k, H * k, W * k
    assert skip_ncdhw.shape == (B, Cout, Dk, Hk, Wk), skip_ncdhw.shape

    if h_tile is None:
        h_tile = _pick_h_tile(H, W, Cout, k)
    assert H % h_tile == 0, (H, h_tile)
    n_h = H // h_tile

    # --- boundary layout plumbing: one NCDHW<->NDHWC transpose each way; all the
    #     "upsample scatter" bookkeeping below is pure reshapes (same linear order).
    x_cl = jnp.transpose(inp_ncdhw, (0, 2, 3, 4, 1)).reshape(B * D, H, W, Cin)
    skip_blk = jnp.transpose(skip_ncdhw, (0, 2, 3, 4, 1)).reshape(
        B * D, k, H, k * W, k * Cout)
    # weight: (Cin, Cout, kd, kh, kw) -> (k^3, Cin, Cout); offset = (kd*k+kh)*k+kw
    w_blk = jnp.transpose(w_tconv, (2, 3, 4, 0, 1)).reshape(k ** 3, Cin, Cout)
    w_blk = w_blk.astype(compute_dtype)

    out_dtype = inp_ncdhw.dtype
    itemsize = np.dtype(out_dtype).itemsize
    out_elems = B * Dk * Hk * Wk * Cout
    cost = pl.CostEstimate(
        flops=2 * B * D * H * W * Cin * Cout * (k ** 3),
        transcendentals=0,
        bytes_accessed=(B * D * H * W * Cin * itemsize                 # input read
                        + w_blk.size * np.dtype(compute_dtype).itemsize
                        + 2 * out_elems * itemsize))                   # skip read + out write

    kernel = functools.partial(_tconv_skip_add_kernel, k=k, compute_dtype=compute_dtype)

    out_blk = pl.pallas_call(
        kernel,
        out_shape=jax.ShapeDtypeStruct((B * D, k, H, k * W, k * Cout), out_dtype),
        grid=(B * D, n_h),
        in_specs=[
            pl.BlockSpec((1, h_tile, W, Cin), lambda m, h: (m, h, 0, 0)),
            pl.BlockSpec((k ** 3, Cin, Cout), lambda m, h: (0, 0, 0)),   # resident weight
            pl.BlockSpec((1, k, h_tile, k * W, k * Cout),
                         lambda m, h: (m, 0, h, 0, 0)),
        ],
        out_specs=pl.BlockSpec((1, k, h_tile, k * W, k * Cout),
                               lambda m, h: (m, 0, h, 0, 0)),
        compiler_params=pltpu.CompilerParams(
            dimension_semantics=("parallel", "parallel"),
            vmem_limit_bytes=48 * 1024 * 1024),
        cost_estimate=cost,
    )(x_cl, w_blk, skip_blk)

    # free reshape back to channels-last upsampled grid, then one boundary transpose
    out_cl = out_blk.reshape(B, Dk, Hk, Wk, Cout)
    # TODO(synk): decoder_block[0] = UNETR++ TransformerBlock (EPA) is not defined in
    #             the provided reference source; applied as identity.
    return jnp.transpose(out_cl, (0, 4, 1, 2, 3))        # back to NCDHW


# ----------------------------------------------------------------------------
# Pure-jnp reference for numerical check
# ----------------------------------------------------------------------------
def reference_forward(inp_ncdhw, skip_ncdhw, w_tconv, k=2):
    B, Cin, D, H, W = inp_ncdhw.shape
    Cout = w_tconv.shape[1]
    x = jnp.transpose(inp_ncdhw, (0, 2, 3, 4, 1))               # (B, D, H, W, Cin)
    # out[b, co, d*k+i, h*k+j, w*k+l] = sum_ci x[b,d,h,w,ci] * w[ci,co,i,j,l]
    up = jnp.einsum("bdhwc,coijl->bdihjwlo", x, w_tconv,
                    precision=jax.lax.Precision.HIGHEST)        # (B, D, k, H, k, W, k, Cout)
    up = up.reshape(B, D * k, H * k, W * k, Cout)
    up = jnp.transpose(up, (0, 4, 1, 2, 3))                     # NCDHW
    out = up + skip_ncdhw
    # decoder_block[0] (TransformerBlock) not defined in the reference source -> identity
    return out


# ----------------------------------------------------------------------------
if __name__ == "__main__":
    # Small config consistent with the module:
    #   spatial_dims=3, in_channels=16, out_channels=32,
    #   upsample_kernel_size=2 (ConvTranspose3d with kernel == stride == 2, bias=False),
    #   conv_decoder=False -> decoder_block is a TransformerBlock stack (identity TODO).
    B, Cin, Cout, D, H, W, k = 2, 16, 32, 4, 4, 4, 2

    key = jax.random.PRNGKey(0)
    key_x, key_s, key_w = jax.random.split(key, 3)
    inp = jax.random.normal(key_x, (B, Cin, D, H, W), dtype=jnp.float32)
    skip = jax.random.normal(key_s, (B, Cout, D * k, H * k, W * k), dtype=jnp.float32)
    # ConvTranspose3d weight layout: (Cin, Cout, k, k, k)
    w_tconv = 0.02 * jax.random.normal(key_w, (Cin, Cout, k, k, k), dtype=jnp.float32)

    ref = jax.block_until_ready(reference_forward(inp, skip, w_tconv, k=k))

    # f32 compute path, explicit 2-step H tiling (tight structural check)
    out_f32 = jax.block_until_ready(
        unetr_up_block_forward(inp, skip, w_tconv, k=k, h_tile=2,
                               compute_dtype=jnp.float32))
    assert out_f32.shape == (B, Cout, D * k, H * k, W * k), out_f32.shape
    np.testing.assert_allclose(np.asarray(out_f32), np.asarray(ref),
                               rtol=2e-3, atol=2e-3)

    # default path: bf16 MXU operands, f32 accumulation, auto h_tile
    out_bf16 = jax.block_until_ready(
        unetr_up_block_forward(inp, skip, w_tconv, k=k))
    np.testing.assert_allclose(np.asarray(out_bf16), np.asarray(ref),
                               rtol=1e-2, atol=1e-2)

    print("KERNEL_OK")
</pallas_src>

<mosaic_0001>
module attributes {stable_mosaic.version = 11 : i64} {
  func.func @_tconv_skip_add_kernel(%arg0: i32, %arg1: i32, %arg2: memref<1x2x4x16xf32, #tpu.memory_space<vmem>>, %arg3: memref<8x16x32xf32, #tpu.memory_space<vmem>>, %arg4: memref<1x2x2x8x64xf32, #tpu.memory_space<vmem>>, %arg5: memref<1x2x2x8x64xf32, #tpu.memory_space<vmem>>) attributes {dimension_semantics = [#tpu.dimension_semantics<parallel>, #tpu.dimension_semantics<parallel>], iteration_bounds = array<i64: 8, 2>, scalar_prefetch = 0 : i64, scratch_operands = 0 : i64, tpu.core_type = #tpu.core_type<tc>, window_params = [{transform_indices = @transform_0, window_bounds = array<i64: 1, 2, 4, 16>}, {pipeline_mode = #tpu.pipeline_mode<synchronous>, transform_indices = @transform_1, window_bounds = array<i64: 8, 16, 32>}, {transform_indices = @transform_2, window_bounds = array<i64: 1, 2, 2, 8, 64>}, {transform_indices = @transform_3, window_bounds = array<i64: 1, 2, 2, 8, 64>}]} {
    %c0 = arith.constant 0 : index
    %c0_0 = arith.constant 0 : index
    %c0_1 = arith.constant 0 : index
    %c0_2 = arith.constant 0 : index
    %0 = vector.load %arg2[%c0, %c0_0, %c0_1, %c0_2] : memref<1x2x4x16xf32, #tpu.memory_space<vmem>>, vector<1x2x4x16xf32>
    %1 = vector.shape_cast %0 : vector<1x2x4x16xf32> to vector<2x4x16xf32>
    %2 = vector.shape_cast %1 : vector<2x4x16xf32> to vector<8x16xf32>
    %c0_3 = arith.constant 0 : index
    %c0_4 = arith.constant 0 : index
    %c0_5 = arith.constant 0 : index
    %3 = vector.load %arg3[%c0_3, %c0_4, %c0_5] : memref<8x16x32xf32, #tpu.memory_space<vmem>>, vector<1x16x32xf32>
    %4 = vector.shape_cast %3 : vector<1x16x32xf32> to vector<16x32xf32>
    %cst = arith.constant dense<0.000000e+00> : vector<8x32xf32>
    %5 = tpu.matmul %2, %4, %cst {dimension_numbers = #tpu.dot_dimension_numbers<[1], [0], [0], [1], [0, 0, 1, 1], [], []>} : vector<8x16xf32>, vector<16x32xf32>, vector<8x32xf32> -> vector<8x32xf32>
    %6 = vector.shape_cast %5 : vector<8x32xf32> to vector<2x4x32xf32>
    %c0_6 = arith.constant 0 : index
    %c0_7 = arith.constant 0 : index
    %c0_8 = arith.constant 0 : index
    %c0_9 = arith.constant 0 : index
    %c0_10 = arith.constant 0 : index
    %7 = vector.load %arg4[%c0_6, %c0_7, %c0_8, %c0_9, %c0_10] : memref<1x2x2x8x64xf32, #tpu.memory_space<vmem>>, vector<1x1x2x4x32xf32>
    %8 = vector.shape_cast %7 : vector<1x1x2x4x32xf32> to vector<2x4x32xf32>
    %9 = arith.addf %6, %8 : vector<2x4x32xf32>
    %c0_11 = arith.constant 0 : index
    %c0_12 = arith.constant 0 : index
    %c0_13 = arith.constant 0 : index
    %c0_14 = arith.constant 0 : index
    %c0_15 = arith.constant 0 : index
    %10 = vector.load %arg5[%c0_11, %c0_12, %c0_13, %c0_14, %c0_15] : memref<1x2x2x8x64xf32, #tpu.memory_space<vmem>>, vector<1x1x2x4x32xf32>
    %11 = vector.shape_cast %10 : vector<1x1x2x4x32xf32> to vector<2x4x32xf32>
    %12 = vector.shape_cast %9 : vector<2x4x32xf32> to vector<1x1x2x4x32xf32>
    tpu.vector_store %arg5[%c0_11, %c0_12, %c0_13, %c0_14, %c0_15], %12 {strides = array<i32>} : memref<1x2x2x8x64xf32, #tpu.memory_space<vmem>>, vector<1x1x2x4x32xf32>,
    %c1 = arith.constant 1 : index
    %c0_16 = arith.constant 0 : index
    %c0_17 = arith.constant 0 : index
    %13 = vector.load %arg3[%c1, %c0_16, %c0_17] : memref<8x16x32xf32, #tpu.memory_space<vmem>>, vector<1x16x32xf32>
    %14 = vector.shape_cast %13 : vector<1x16x32xf32> to vector<16x32xf32>
    %cst_18 = arith.constant dense<0.000000e+00> : vector<8x32xf32>
    %15 = tpu.matmul %2, %14, %cst_18 {dimension_numbers = #tpu.dot_dimension_numbers<[1], [0], [0], [1], [0, 0, 1, 1], [], []>} : vector<8x16xf32>, vector<16x32xf32>, vector<8x32xf32> -> vector<8x32xf32>
    %16 = vector.shape_cast %15 : vector<8x32xf32> to vector<2x4x32xf32>
    %c0_19 = arith.constant 0 : index
    %c0_20 = arith.constant 0 : index
    %c0_21 = arith.constant 0 : index
    %c0_22 = arith.constant 0 : index
    %c32 = arith.constant 32 : index
    %17 = vector.load %arg4[%c0_19, %c0_20, %c0_21, %c0_22, %c32] : memref<1x2x2x8x64xf32, #tpu.memory_space<vmem>>, vector<1x1x2x4x32xf32>
    %18 = vector.shape_cast %17 : vector<1x1x2x4x32xf32> to vector<2x4x32xf32>
    %19 = arith.addf %16, %18 : vector<2x4x32xf32>
    %c0_23 = arith.constant 0 : index
    %c0_24 = arith.constant 0 : index
    %c0_25 = arith.constant 0 : index
    %c0_26 = arith.constant 0 : index
    %c32_27 = arith.constant 32 : index
    %20 = vector.load %arg5[%c0_23, %c0_24, %c0_25, %c0_26, %c32_27] : memref<1x2x2x8x64xf32, #tpu.memory_space<vmem>>, vector<1x1x2x4x32xf32>
    %21 = vector.shape_cast %20 : vector<1x1x2x4x32xf32> to vector<2x4x32xf32>
    %22 = vector.shape_cast %19 : vector<2x4x32xf32> to vector<1x1x2x4x32xf32>
    tpu.vector_store %arg5[%c0_23, %c0_24, %c0_25, %c0_26, %c32_27], %22 {strides = array<i32>} : memref<1x2x2x8x64xf32, #tpu.memory_space<vmem>>, vector<1x1x2x4x32xf32>,
    %c2 = arith.constant 2 : index
    %c0_28 = arith.constant 0 : index
    %c0_29 = arith.constant 0 : index
    %23 = vector.load %arg3[%c2, %c0_28, %c0_29] : memref<8x16x32xf32, #tpu.memory_space<vmem>>, vector<1x16x32xf32>
    %24 = vector.shape_cast %23 : vector<1x16x32xf32> to vector<16x32xf32>
    %cst_30 = arith.constant dense<0.000000e+00> : vector<8x32xf32>
    %25 = tpu.matmul %2, %24, %cst_30 {dimension_numbers = #tpu.dot_dimension_numbers<[1], [0], [0], [1], [0, 0, 1, 1], [], []>} : vector<8x16xf32>, vector<16x32xf32>, vector<8x32xf32> -> vector<8x32xf32>
    %26 = vector.shape_cast %25 : vector<8x32xf32> to vector<2x4x32xf32>
    %c0_31 = arith.constant 0 : index
    %c0_32 = arith.constant 0 : index
    %c0_33 = arith.constant 0 : index
    %c4 = arith.constant 4 : index
    %c0_34 = arith.constant 0 : index
    %27 = vector.load %arg4[%c0_31, %c0_32, %c0_33, %c4, %c0_34] : memref<1x2x2x8x64xf32, #tpu.memory_space<vmem>>, vector<1x1x2x4x32xf32>
    %28 = vector.shape_cast %27 : vector<1x1x2x4x32xf32> to vector<2x4x32xf32>
    %29 = arith.addf %26, %28 : vector<2x4x32xf32>
    %c0_35 = arith.constant 0 : index
    %c0_36 = arith.constant 0 : index
    %c0_37 = arith.constant 0 : index
    %c4_38 = arith.constant 4 : index
    %c0_39 = arith.constant 0 : index
    %30 = vector.load %arg5[%c0_35, %c0_36, %c0_37, %c4_38, %c0_39] : memref<1x2x2x8x64xf32, #tpu.memory_space<vmem>>, vector<1x1x2x4x32xf32>
    %31 = vector.shape_cast %30 : vector<1x1x2x4x32xf32> to vector<2x4x32xf32>
    %32 = vector.shape_cast %29 : vector<2x4x32xf32> to vector<1x1x2x4x32xf32>
    tpu.vector_store %arg5[%c0_35, %c0_36, %c0_37, %c4_38, %c0_39], %32 {strides = array<i32>} : memref<1x2x2x8x64xf32, #tpu.memory_space<vmem>>, vector<1x1x2x4x32xf32>,
    %c3 = arith.constant 3 : index
    %c0_40 = arith.constant 0 : index
    %c0_41 = arith.constant 0 : index
    %33 = vector.load %arg3[%c3, %c0_40, %c0_41] : memref<8x16x32xf32, #tpu.memory_space<vmem>>, vector<1x16x32xf32>
    %34 = vector.shape_cast %33 : vector<1x16x32xf32> to vector<16x32xf32>
    %cst_42 = arith.constant dense<0.000000e+00> : vector<8x32xf32>
    %35 = tpu.matmul %2, %34, %cst_42 {dimension_numbers = #tpu.dot_dimension_numbers<[1], [0], [0], [1], [0, 0, 1, 1], [], []>} : vector<8x16xf32>, vector<16x32xf32>, vector<8x32xf32> -> vector<8x32xf32>
    %36 = vector.shape_cast %35 : vector<8x32xf32> to vector<2x4x32xf32>
    %c0_43 = arith.constant 0 : index
    %c0_44 = arith.constant 0 : index
    %c0_45 = arith.constant 0 : index
    %c4_46 = arith.constant 4 : index
    %c32_47 = arith.constant 32 : index
    %37 = vector.load %arg4[%c0_43, %c0_44, %c0_45, %c4_46, %c32_47] : memref<1x2x2x8x64xf32, #tpu.memory_space<vmem>>, vector<1x1x2x4x32xf32>
    %38 = vector.shape_cast %37 : vector<1x1x2x4x32xf32> to vector<2x4x32xf32>
    %39 = arith.addf %36, %38 : vector<2x4x32xf32>
    %c0_48 = arith.constant 0 : index
    %c0_49 = arith.constant 0 : index
    %c0_50 = arith.constant 0 : index
    %c4_51 = arith.constant 4 : index
    %c32_52 = arith.constant 32 : index
    %40 = vector.load %arg5[%c0_48, %c0_49, %c0_50, %c4_51, %c32_52] : memref<1x2x2x8x64xf32, #tpu.memory_space<vmem>>, vector<1x1x2x4x32xf32>
    %41 = vector.shape_cast %40 : vector<1x1x2x4x32xf32> to vector<2x4x32xf32>
    %42 = vector.shape_cast %39 : vector<2x4x32xf32> to vector<1x1x2x4x32xf32>
    tpu.vector_store %arg5[%c0_48, %c0_49, %c0_50, %c4_51, %c32_52], %42 {strides = array<i32>} : memref<1x2x2x8x64xf32, #tpu.memory_space<vmem>>, vector<1x1x2x4x32xf32>,
    %c4_53 = arith.constant 4 : index
    %c0_54 = arith.constant 0 : index
    %c0_55 = arith.constant 0 : index
    %43 = vector.load %arg3[%c4_53, %c0_54, %c0_55] : memref<8x16x32xf32, #tpu.memory_space<vmem>>, vector<1x16x32xf32>
    %44 = vector.shape_cast %43 : vector<1x16x32xf32> to vector<16x32xf32>
    %cst_56 = arith.constant dense<0.000000e+00> : vector<8x32xf32>
    %45 = tpu.matmul %2, %44, %cst_56 {dimension_numbers = #tpu.dot_dimension_numbers<[1], [0], [0], [1], [0, 0, 1, 1], [], []>} : vector<8x16xf32>, vector<16x32xf32>, vector<8x32xf32> -> vector<8x32xf32>
    %46 = vector.shape_cast %45 : vector<8x32xf32> to vector<2x4x32xf32>
    %c0_57 = arith.constant 0 : index
    %c1_58 = arith.constant 1 : index
    %c0_59 = arith.constant 0 : index
    %c0_60 = arith.constant 0 : index
    %c0_61 = arith.constant 0 : index
    %47 = vector.load %arg4[%c0_57, %c1_58, %c0_59, %c0_60, %c0_61] : memref<1x2x2x8x64xf32, #tpu.memory_space<vmem>>, vector<1x1x2x4x32xf32>
    %48 = vector.shape_cast %47 : vector<1x1x2x4x32xf32> to vector<2x4x32xf32>
    %49 = arith.addf %46, %48 : vector<2x4x32xf32>
    %c0_62 = arith.constant 0 : index
    %c1_63 = arith.constant 1 : index
    %c0_64 = arith.constant 0 : index
    %c0_65 = arith.constant 0 : index
    %c0_66 = arith.constant 0 : index
    %50 = vector.load %arg5[%c0_62, %c1_63, %c0_64, %c0_65, %c0_66] : memref<1x2x2x8x64xf32, #tpu.memory_space<vmem>>, vector<1x1x2x4x32xf32>
    %51 = vector.shape_cast %50 : vector<1x1x2x4x32xf32> to vector<2x4x32xf32>
    %52 = vector.shape_cast %49 : vector<2x4x32xf32> to vector<1x1x2x4x32xf32>
    tpu.vector_store %arg5[%c0_62, %c1_63, %c0_64, %c0_65, %c0_66], %52 {strides = array<i32>} : memref<1x2x2x8x64xf32, #tpu.memory_space<vmem>>, vector<1x1x2x4x32xf32>,
    %c5 = arith.constant 5 : index
    %c0_67 = arith.constant 0 : index
    %c0_68 = arith.constant 0 : index
    %53 = vector.load %arg3[%c5, %c0_67, %c0_68] : memref<8x16x32xf32, #tpu.memory_space<vmem>>, vector<1x16x32xf32>
    %54 = vector.shape_cast %53 : vector<1x16x32xf32> to vector<16x32xf32>
    %cst_69 = arith.constant dense<0.000000e+00> : vector<8x32xf32>
    %55 = tpu.matmul %2, %54, %cst_69 {dimension_numbers = #tpu.dot_dimension_numbers<[1], [0], [0], [1], [0, 0, 1, 1], [], []>} : vector<8x16xf32>, vector<16x32xf32>, vector<8x32xf32> -> vector<8x32xf32>
    %56 = vector.shape_cast %55 : vector<8x32xf32> to vector<2x4x32xf32>
    %c0_70 = arith.constant 0 : index
    %c1_71 = arith.constant 1 : index
    %c0_72 = arith.constant 0 : index
    %c0_73 = arith.constant 0 : index
    %c32_74 = arith.constant 32 : index
    %57 = vector.load %arg4[%c0_70, %c1_71, %c0_72, %c0_73, %c32_74] : memref<1x2x2x8x64xf32, #tpu.memory_space<vmem>>, vector<1x1x2x4x32xf32>
    %58 = vector.shape_cast %57 : vector<1x1x2x4x32xf32> to vector<2x4x32xf32>
    %59 = arith.addf %56, %58 : vector<2x4x32xf32>
    %c0_75 = arith.constant 0 : index
    %c1_76 = arith.constant 1 : index
    %c0_77 = arith.constant 0 : index
    %c0_78 = arith.constant 0 : index
    %c32_79 = arith.constant 32 : index
    %60 = vector.load %arg5[%c0_75, %c1_76, %c0_77, %c0_78, %c32_79] : memref<1x2x2x8x64xf32, #tpu.memory_space<vmem>>, vector<1x1x2x4x32xf32>
    %61 = vector.shape_cast %60 : vector<1x1x2x4x32xf32> to vector<2x4x32xf32>
    %62 = vector.shape_cast %59 : vector<2x4x32xf32> to vector<1x1x2x4x32xf32>
    tpu.vector_store %arg5[%c0_75, %c1_76, %c0_77, %c0_78, %c32_79], %62 {strides = array<i32>} : memref<1x2x2x8x64xf32, #tpu.memory_space<vmem>>, vector<1x1x2x4x32xf32>,
    %c6 = arith.constant 6 : index
    %c0_80 = arith.constant 0 : index
    %c0_81 = arith.constant 0 : index
    %63 = vector.load %arg3[%c6, %c0_80, %c0_81] : memref<8x16x32xf32, #tpu.memory_space<vmem>>, vector<1x16x32xf32>
    %64 = vector.shape_cast %63 : vector<1x16x32xf32> to vector<16x32xf32>
    %cst_82 = arith.constant dense<0.000000e+00> : vector<8x32xf32>
    %65 = tpu.matmul %2, %64, %cst_82 {dimension_numbers = #tpu.dot_dimension_numbers<[1], [0], [0], [1], [0, 0, 1, 1], [], []>} : vector<8x16xf32>, vector<16x32xf32>, vector<8x32xf32> -> vector<8x32xf32>
    %66 = vector.shape_cast %65 : vector<8x32xf32> to vector<2x4x32xf32>
    %c0_83 = arith.constant 0 : index
    %c1_84 = arith.constant 1 : index
    %c0_85 = arith.constant 0 : index
    %c4_86 = arith.constant 4 : index
    %c0_87 = arith.constant 0 : index
    %67 = vector.load %arg4[%c0_83, %c1_84, %c0_85, %c4_86, %c0_87] : memref<1x2x2x8x64xf32, #tpu.memory_space<vmem>>, vector<1x1x2x4x32xf32>
    %68 = vector.shape_cast %67 : vector<1x1x2x4x32xf32> to vector<2x4x32xf32>
    %69 = arith.addf %66, %68 : vector<2x4x32xf32>
    %c0_88 = arith.constant 0 : index
    %c1_89 = arith.constant 1 : index
    %c0_90 = arith.constant 0 : index
    %c4_91 = arith.constant 4 : index
    %c0_92 = arith.constant 0 : index
    %70 = vector.load %arg5[%c0_88, %c1_89, %c0_90, %c4_91, %c0_92] : memref<1x2x2x8x64xf32, #tpu.memory_space<vmem>>, vector<1x1x2x4x32xf32>
    %71 = vector.shape_cast %70 : vector<1x1x2x4x32xf32> to vector<2x4x32xf32>
    %72 = vector.shape_cast %69 : vector<2x4x32xf32> to vector<1x1x2x4x32xf32>
    tpu.vector_store %arg5[%c0_88, %c1_89, %c0_90, %c4_91, %c0_92], %72 {strides = array<i32>} : memref<1x2x2x8x64xf32, #tpu.memory_space<vmem>>, vector<1x1x2x4x32xf32>,
    %c7 = arith.constant 7 : index
    %c0_93 = arith.constant 0 : index
    %c0_94 = arith.constant 0 : index
    %73 = vector.load %arg3[%c7, %c0_93, %c0_94] : memref<8x16x32xf32, #tpu.memory_space<vmem>>, vector<1x16x32xf32>
    %74 = vector.shape_cast %73 : vector<1x16x32xf32> to vector<16x32xf32>
    %cst_95 = arith.constant dense<0.000000e+00> : vector<8x32xf32>
    %75 = tpu.matmul %2, %74, %cst_95 {dimension_numbers = #tpu.dot_dimension_numbers<[1], [0], [0], [1], [0, 0, 1, 1], [], []>} : vector<8x16xf32>, vector<16x32xf32>, vector<8x32xf32> -> vector<8x32xf32>
    %76 = vector.shape_cast %75 : vector<8x32xf32> to vector<2x4x32xf32>
    %c0_96 = arith.constant 0 : index
    %c1_97 = arith.constant 1 : index
    %c0_98 = arith.constant 0 : index
    %c4_99 = arith.constant 4 : index
    %c32_100 = arith.constant 32 : index
    %77 = vector.load %arg4[%c0_96, %c1_97, %c0_98, %c4_99, %c32_100] : memref<1x2x2x8x64xf32, #tpu.memory_space<vmem>>, vector<1x1x2x4x32xf32>
    %78 = vector.shape_cast %77 : vector<1x1x2x4x32xf32> to vector<2x4x32xf32>
    %79 = arith.addf %76, %78 : vector<2x4x32xf32>
    %c0_101 = arith.constant 0 : index
    %c1_102 = arith.constant 1 : index
    %c0_103 = arith.constant 0 : index
    %c4_104 = arith.constant 4 : index
    %c32_105 = arith.constant 32 : index
    %80 = vector.load %arg5[%c0_101, %c1_102, %c0_103, %c4_104, %c32_105] : memref<1x2x2x8x64xf32, #tpu.memory_space<vmem>>, vector<1x1x2x4x32xf32>
    %81 = vector.shape_cast %80 : vector<1x1x2x4x32xf32> to vector<2x4x32xf32>
    %82 = vector.shape_cast %79 : vector<2x4x32xf32> to vector<1x1x2x4x32xf32>
    tpu.vector_store %arg5[%c0_101, %c1_102, %c0_103, %c4_104, %c32_105], %82 {strides = array<i32>} : memref<1x2x2x8x64xf32, #tpu.memory_space<vmem>>, vector<1x1x2x4x32xf32>,
    return
  }
  func.func @transform_0(%arg0: i32, %arg1: i32) -> (i32, i32, i32, i32) {
    %c0_i32 = arith.constant 0 : i32
    %c0_i32_0 = arith.constant 0 : i32
    %c0_i32_1 = arith.constant 0 : i32
    return %arg0, %arg1, %c0_i32, %c0_i32_0 : i32, i32, i32, i32
  }
  func.func @transform_1(%arg0: i32, %arg1: i32) -> (i32, i32, i32) {
    %c0_i32 = arith.constant 0 : i32
    %c0_i32_0 = arith.constant 0 : i32
    %c0_i32_1 = arith.constant 0 : i32
    %c0_i32_2 = arith.constant 0 : i32
    return %c0_i32, %c0_i32_0, %c0_i32_1 : i32, i32, i32
  }
  func.func @transform_2(%arg0: i32, %arg1: i32) -> (i32, i32, i32, i32, i32) {
    %c0_i32 = arith.constant 0 : i32
    %c0_i32_0 = arith.constant 0 : i32
    %c0_i32_1 = arith.constant 0 : i32
    %c0_i32_2 = arith.constant 0 : i32
    return %arg0, %c0_i32, %arg1, %c0_i32_0, %c0_i32_1 : i32, i32, i32, i32, i32
  }
  func.func @transform_3(%arg0: i32, %arg1: i32) -> (i32, i32, i32, i32, i32) {
    %c0_i32 = arith.constant 0 : i32
    %c0_i32_0 = arith.constant 0 : i32
    %c0_i32_1 = arith.constant 0 : i32
    %c0_i32_2 = arith.constant 0 : i32
    return %arg0, %c0_i32, %arg1, %c0_i32_0, %c0_i32_1 : i32, i32, i32, i32, i32
  }
}

</mosaic_0001>

<llo_original>
// kernel: tpu_custom_call.1
$region0: #{tpu_custom_call.1}
  #allocation0 [shape = 'u32[]', space=smem, size = 0x4, offset = 0x4, fixed_abs, tag = 'smem constant byte address 0x4 - core index']
  #allocation1 [shape = 'u32[72,128]{1,0:T(1,128)}', space=vmem, size = 0x9000, scoped, tag = 'internal scratch']
  #allocation9 [shape = 's32[]', space=sflag, size = 0x4, offset = 0, fixed_abs, tag = 'sflag constant byte address 0x0 - dummy sync flag']
  #allocation11 [shape = 's32[]', space=sflag, size = 0x4, offset = 0, fixed_abs, tag = 'sflag constant byte address 0x0 - dummy sync flag']
  %s0 = inlined_call_operand.hbm [shape: f32[8,4,4,16], index: 0, kind: input, shape index: {}]
  %s1 = inlined_call_operand.hbm [shape: f32[8,16,32], index: 1, kind: input, shape index: {}]
  %s2 = inlined_call_operand.hbm [shape: f32[8,2,4,8,64], index: 2, kind: input, shape index: {}]
  %s3 = inlined_call_operand.hbm [shape: f32[8,2,4,8,64], index: 3, kind: output, shape index: {}]
  %s4 = sld [smem:[#allocation0]]
  $region57: #{tpu_custom_call.1} parent=0
    _
  %s6 = ssub.s32 1, %s4
  %s7 = scalar_select 0, %s6, %s4
  $region1: #{tpu_custom_call.1} parent=0
    #allocation2 [shape = 'u8[8192]{0}', space=vmem, size = 0x2000, scoped, tag = 'input window, operand 0']
    #allocation3 [shape = 's32[2]{0}', space=sflag, size = 0x8, scoped, tag = 'scoped memory for tpu_custom_call.1']
    #allocation4 [shape = 's32[2]{0}', space=sflag, size = 0x8, scoped, tag = 'scoped memory for tpu_custom_call.1']
    #allocation5 [shape = 'u8[65536]{0}', space=vmem, size = 0x10000, scoped, tag = 'input window, operand 1, single buffered']
    #allocation6 [shape = 's32[1]{0}', space=sflag, size = 0x4, scoped, tag = 'scoped memory for tpu_custom_call.1']
    #allocation7 [shape = 'u8[32768]{0}', space=vmem, size = 0x8000, scoped, tag = 'input window, operand 2']
    #allocation8 [shape = 'u8[32768]{0}', space=vmem, size = 0x8000, scoped, tag = 'output window, operand 0']
    %8 = vsyncpa [#allocation3], 0
    %s9 = scalar_lea.sflag [#allocation3], 1
    %10 = vsyncpa %s9, 0
    %11 = vsyncpa [#allocation6], 0
    %12 = vsyncpa [#allocation4], 0
    %s13 = scalar_lea.sflag [#allocation4], 1
    %14 = vsyncpa %s13, 0
    loop: start=0, step=1, limit=18
    $region2: #{tpu_custom_call.1} parent=1 // loop_pre_header
      _
    $region3: #{tpu_custom_call.1} parent=1 // loop_header
      %s16 = sphi 0, %s20
      %p17 = scmp.ge.s32.totalorder %s16, 18
      %s23 = sphi 0, %s35
      %s24 = sphi 0, %s31
      %s25 = sphi 0, %s23
      %s26 = sphi 0, %s24
      %s27 = sphi 0, %s25
      %s28 = sphi 0, %s26
      %s40 = sphi 0, %s42
      %s43 = sphi 0, %s40
      %s44 = sphi 0, %s43
      %s60 = sphi 0, %s44
      %s64 = sphi 0, %s64
      %s66 = sphi 0, %s64
      %s67 = sphi 0, %s66
      %s81 = sphi 0, %s67
      %s89 = sphi 0, %s91
      %s92 = sphi 0, %s89
      %s93 = sphi 0, %s92
      %s109 = sphi 0, %s93
      %s117 = sphi 0, %s119
      %s120 = sphi 0, %s117
      %s121 = sphi 0, %s120
      %s137 = sphi 0, %s121
    $region4: #{tpu_custom_call.1} parent=1 // loop_header_branch
      %19 = sbr.rel (%p17) target = $region8
    $region5: #{tpu_custom_call.1} parent=1 // loop_body
      %s21 = ssub.s32 %s16, 1
      %s22 = ssub.s32 %s16, 2
      %s29 = sadd.s32 1, %s24
      %p30 = scmp.ge.s32.totalorder %s29, 2
      %s31 = scalar_select %p30, 0, %s29
      %s32 = sadd.s32 1, %s23
      %s33 = scalar_select %p30, %s32, %s23
      %p34 = scmp.ge.s32.totalorder %s33, 8
      %s35 = scalar_select %p34, 0, %s33
      %s36 = ssub.s32 %s23, %s35
      %s37 = ssub.s32 %s24, %s31
      %s38 = sor.u32 %s36, %s37
      %p39 = scmp.eq.s32.totalorder %s38, 0
      %s41 = sadd.s32 %s40, 1
      %s42 = scalar_select %p39, %s40, %s41
      %p45 = pneg %p39
      %p46 = scmp.eq.s32.totalorder %s16, 15
      %p47 = por %p45, %p46
      %p48 = scmp.ne.s32.totalorder %s40, %s43
      %p49 = scmp.eq.s32.totalorder %s16, 0
      %p50 = por %p48, %p49
      %p51 = scmp.ne.s32.totalorder %s40, %s43
      %p52 = scmp.eq.s32.totalorder %s21, 15
      %p53 = por %p51, %p52
      %p54 = scmp.ne.s32.totalorder %s43, %s44
      %p55 = scmp.eq.s32.totalorder %s21, 0
      %p56 = por %p54, %p55
      %p57 = scmp.ne.s32.totalorder %s43, %s44
      %p58 = scmp.eq.s32.totalorder %s22, 15
      %p59 = por %p57, %p58
      %p61 = scmp.ne.s32.totalorder %s44, %s60
      %p62 = scmp.eq.s32.totalorder %s22, 0
      %p63 = por %p61, %p62
      %s65 = sadd.s32 %s64, 1
      %p68 = scmp.eq.s32.totalorder %s16, 15
      %p69 = scmp.ne.s32.totalorder %s64, %s66
      %p70 = scmp.eq.s32.totalorder %s16, 0
      %p71 = por %p69, %p70
      %p72 = scmp.ne.s32.totalorder %s64, %s66
      %p73 = scmp.eq.s32.totalorder %s21, 15
      %p74 = por %p72, %p73
      %p75 = scmp.ne.s32.totalorder %s66, %s67
      %p76 = scmp.eq.s32.totalorder %s21, 0
      %p77 = por %p75, %p76
      %p78 = scmp.ne.s32.totalorder %s66, %s67
      %p79 = scmp.eq.s32.totalorder %s22, 15
      %p80 = por %p78, %p79
      %p82 = scmp.ne.s32.totalorder %s67, %s81
      %p83 = scmp.eq.s32.totalorder %s22, 0
      %p84 = por %p82, %p83
      %s85 = ssub.s32 %s23, %s35
      %s86 = ssub.s32 %s24, %s31
      %s87 = sor.u32 %s85, %s86
      %p88 = scmp.eq.s32.totalorder %s87, 0
      %s90 = sadd.s32 %s89, 1
      %s91 = scalar_select %p88, %s89, %s90
      %p94 = pneg %p88
      %p95 = scmp.eq.s32.totalorder %s16, 15
      %p96 = por %p94, %p95
      %p97 = scmp.ne.s32.totalorder %s89, %s92
      %p98 = scmp.eq.s32.totalorder %s16, 0
      %p99 = por %p97, %p98
      %p100 = scmp.ne.s32.totalorder %s89, %s92
      %p101 = scmp.eq.s32.totalorder %s21, 15
      %p102 = por %p100, %p101
      %p103 = scmp.ne.s32.totalorder %s92, %s93
      %p104 = scmp.eq.s32.totalorder %s21, 0
      %p105 = por %p103, %p104
      %p106 = scmp.ne.s32.totalorder %s92, %s93
      %p107 = scmp.eq.s32.totalorder %s22, 15
      %p108 = por %p106, %p107
      %p110 = scmp.ne.s32.totalorder %s93, %s109
      %p111 = scmp.eq.s32.totalorder %s22, 0
      %p112 = por %p110, %p111
      %s113 = ssub.s32 %s23, %s35
      %s114 = ssub.s32 %s24, %s31
      %s115 = sor.u32 %s113, %s114
      %p116 = scmp.eq.s32.totalorder %s115, 0
      %s118 = sadd.s32 %s117, 1
      %s119 = scalar_select %p116, %s117, %s118
      %p122 = pneg %p116
      %p123 = scmp.eq.s32.totalorder %s16, 15
      %p124 = por %p122, %p123
      %p125 = scmp.ne.s32.totalorder %s117, %s120
      %p126 = scmp.eq.s32.totalorder %s16, 0
      %p127 = por %p125, %p126
      %p128 = scmp.ne.s32.totalorder %s117, %s120
      %p129 = scmp.eq.s32.totalorder %s21, 15
      %p130 = por %p128, %p129
      %p131 = scmp.ne.s32.totalorder %s120, %s121
      %p132 = scmp.eq.s32.totalorder %s21, 0
      %p133 = por %p131, %p132
      %p134 = scmp.ne.s32.totalorder %s120, %s121
      %p135 = scmp.eq.s32.totalorder %s22, 15
      %p136 = por %p134, %p135
      %p138 = scmp.ne.s32.totalorder %s121, %s137
      %p139 = scmp.eq.s32.totalorder %s22, 0
      %p140 = por %p138, %p139
      %p141 = scmp.le.s32.totalorder 1, %s16
      %p142 = scmp.lt.s32.totalorder %s16, 17
      %p143 = pnand %p141, %p142
      %p144 = pneg %p143
      // Predicated region
      $region9: #{tpu_custom_call.1} parent=5 // pred_check
        _
      $region10: #{tpu_custom_call.1} parent=5 // pred_check_branch
        %146 = sbr.rel (%p143) target = $region12
      $region11: #{tpu_custom_call.1} parent=5 // pred_region
        %s147 = ssub.s32 %s16, 1
        // Predicated region
        $region13: #{tpu_custom_call.1} parent=11 // pred_check
          %p148 = pneg %p77
        $region14: #{tpu_custom_call.1} parent=11 // pred_check_branch
          %150 = sbr.rel (%p148) target = $region16
        $region15: #{tpu_custom_call.1} parent=11 // pred_region
          %152 = vsyncadd [#allocation6], 0
          %s153 = sshll.u32 %s1, 4
          %s154 = int_to_ptr.hbm [resolvable:$true] %s153
          %s155 = sshll.u32 [#allocation5], 4
          %s156 = int_to_ptr.vmem [resolvable:$true] %s155
          %161 = dma.hbm_to_vmem [thread:$0]  %s154, 2048, %s156, [#allocation6], 128, 128, 8
        $region16: #{tpu_custom_call.1} parent=11 // pred_fallthru
          _
      $region12: #{tpu_custom_call.1} parent=5 // pred_fallthru
        _
      %p162 = scmp.lt.s32.totalorder %s16, 16
      // Predicated region
      $region17: #{tpu_custom_call.1} parent=5 // pred_check
        %p163 = pneg %p162
      $region18: #{tpu_custom_call.1} parent=5 // pred_check_branch
        %165 = sbr.rel (%p163) target = $region20
      $region19: #{tpu_custom_call.1} parent=5 // pred_region
        // Predicated region
        $region21: #{tpu_custom_call.1} parent=19 // pred_check
          %p166 = pneg %p50
        $region22: #{tpu_custom_call.1} parent=19 // pred_check_branch
          %168 = sbr.rel (%p166) target = $region24
        $region23: #{tpu_custom_call.1} parent=19 // pred_region
          %s169 = sand.u32 %s16, 1
          %s170 = scalar_lea.sflag [#allocation3], %s169
          %s171 = sand.u32 %s40, 1
          %s172 = smul.addr %s171, 8
          %s173 = scalar_lea.vmem [#allocation2], %s172
          %s174 = smul.u32 2, %s24
          %176 = vsyncadd %s170, 0
          %s177 = smul.addr %s23, 4
          %s178 = sadd.s32 %s174, %s177
          %s179 = smul.addr %s178, 4
          %s180 = scalar_lea.hbm %s0, %s179
          %s181 = sshll.u32 %s180, 4
          %s182 = int_to_ptr.hbm [resolvable:$true] %s181
          %s183 = sshll.u32 %s173, 4
          %s184 = int_to_ptr.vmem [resolvable:$true] %s183
          %189 = dma.hbm_to_vmem [thread:$0]  %s182, 128, %s184, %s170, 64, 64, 4
        $region24: #{tpu_custom_call.1} parent=19 // pred_fallthru
          _
        // Predicated region
        $region25: #{tpu_custom_call.1} parent=19 // pred_check
          %p190 = pneg %p99
        $region26: #{tpu_custom_call.1} parent=19 // pred_check_branch
          %192 = sbr.rel (%p190) target = $region28
        $region27: #{tpu_custom_call.1} parent=19 // pred_region
          #allocation10 [shape = 'u32[6]{0}', space=smem, size = 0x18, scoped, tag = 'DMA stride descriptor']
          %s193 = sand.u32 %s16, 1
          %s194 = scalar_lea.sflag [#allocation3], %s193
          %s195 = sand.u32 %s89, 1
          %s196 = smul.addr %s195, 32
          %s197 = scalar_lea.vmem [#allocation7], %s196
          %s198 = smul.u32 2, %s24
          %200 = vsyncadd %s194, 0
          %s201 = smul.addr %s23, 8
          %s202 = sadd.s32 %s198, %s201
          %s203 = smul.addr %s202, 8
          %s204 = scalar_lea.hbm %s2, %s203
          %s206 = sshll.u32 1, 14
          %s207 = sxor.u32 4294967295, %s206
          %s209 = sld [smem:[#allocation0]]
          %s210 = sadd.s32 2, %s209
          %s212 = sshll.u32 7, 26
          %s213 = sxor.u32 4294967295, %s212
          %s214 = sand.u32 0, %s213
          %s215 = sshll.u32 %s210, 26
          %s216 = sor.u32 %s214, %s215
          %s217 = sshll.u32 %s204, 4
          %s218 = int_to_ptr.hbm [resolvable:$true] %s217
          %s219 = sshll.u32 %s197, 4
          %s220 = int_to_ptr.vmem [resolvable:$true] %s219
          %226 = sst [smem:[#allocation10]] 512
          %s227 = scalar_lea.smem [#allocation10], 1
          %228 = sst [smem:[%s227]] 256
          %s229 = scalar_lea.smem [#allocation10], 2
          %230 = sst [smem:[%s229]] 2
          %s231 = scalar_lea.smem [#allocation10], 3
          %232 = sst [smem:[%s231]] 128
          %s233 = scalar_lea.smem [#allocation10], 4
          %234 = sst [smem:[%s233]] 128
          %s235 = scalar_lea.smem [#allocation10], 5
          %236 = sst [smem:[%s235]] 8
          %238 = dma.general %s218, 512, %s220, %s194, [#allocation9], [#allocation10], %s216, 0
        $region28: #{tpu_custom_call.1} parent=19 // pred_fallthru
          _
      $region20: #{tpu_custom_call.1} parent=5 // pred_fallthru
        _
      %p239 = scmp.le.s32.totalorder 1, %s16
      %p240 = scmp.lt.s32.totalorder %s16, 17
      %p241 = pnand %p239, %p240
      %p242 = pneg %p241
      // Predicated region
      $region29: #{tpu_custom_call.1} parent=5 // pred_check
        _
      $region30: #{tpu_custom_call.1} parent=5 // pred_check_branch
        %244 = sbr.rel (%p241) target = $region32
      $region31: #{tpu_custom_call.1} parent=5 // pred_region
        %s245 = ssub.s32 %s16, 1
        %s246 = sand.u32 %s21, 1
        %s247 = scalar_lea.sflag [#allocation3], %s246
        %s248 = sand.u32 %s43, 1
        %s249 = smul.addr %s248, 8
        %s250 = scalar_lea.vmem [#allocation2], %s249
        // Predicated region
        $region33: #{tpu_custom_call.1} parent=31 // pred_check
          %p251 = pneg %p56
        $region34: #{tpu_custom_call.1} parent=31 // pred_check_branch
          %253 = sbr.rel (%p251) target = $region36
        $region35: #{tpu_custom_call.1} parent=31 // pred_region
          %255 = dma.done %s247, 128
        $region36: #{tpu_custom_call.1} parent=31 // pred_fallthru
          _
        // Predicated region
        $region37: #{tpu_custom_call.1} parent=31 // pred_check
          %p256 = pneg %p77
        $region38: #{tpu_custom_call.1} parent=31 // pred_check_branch
          %258 = sbr.rel (%p256) target = $region40
        $region39: #{tpu_custom_call.1} parent=31 // pred_region
          %260 = dma.done [#allocation6], 2048
        $region40: #{tpu_custom_call.1} parent=31 // pred_fallthru
          _
        %s261 = sand.u32 %s21, 1
        %s262 = scalar_lea.sflag [#allocation3], %s261
        %s263 = sand.u32 %s92, 1
        %s264 = smul.addr %s263, 32
        %s265 = scalar_lea.vmem [#allocation7], %s264
        // Predicated region
        $region41: #{tpu_custom_call.1} parent=31 // pred_check
          %p266 = pneg %p105
        $region42: #{tpu_custom_call.1} parent=31 // pred_check_branch
          %268 = sbr.rel (%p266) target = $region44
        $region43: #{tpu_custom_call.1} parent=31 // pred_region
          %270 = dma.done %s262, 512
        $region44: #{tpu_custom_call.1} parent=31 // pred_fallthru
          _
        %s271 = sand.u32 %s21, 1
        %s272 = scalar_lea.sflag [#allocation3], %s271
        %s273 = sand.u32 %s43, 1
        %s274 = smul.addr %s273, 8
        %s275 = scalar_lea.vmem [#allocation2], %s274
        %p276 = pneg %p56
        %p277 = pneg %p53
        %p278 = pneg %p77
        %p279 = pneg %p74
        %s280 = sand.u32 %s21, 1
        %s281 = scalar_lea.sflag [#allocation3], %s280
        %s282 = sand.u32 %s92, 1
        %s283 = smul.addr %s282, 32
        %s284 = scalar_lea.vmem [#allocation7], %s283
        %p285 = pneg %p105
        %p286 = pneg %p102
        %p287 = pneg %p133
        %p288 = pneg %p130
        %s289 = sand.u32 %s120, 1
        %s290 = scalar_lea.sflag [#allocation4], %s289
        %s291 = sand.u32 %s120, 1
        %s292 = smul.addr %s291, 32
        %s293 = scalar_lea.vmem [#allocation8], %s292
        %s294 = smul.u32 2, %s26
        %s295 = smul.u32 2, %s26
        %s296 = smul.u32 2, %s26
        %v297 = vld [vmem:[%s250] sm:$0xf]
        %v298 = vld [vmem:[%s250 + $0x4] sm:$0xf]
        %v299 = vld [vmem:[#allocation5] sm:$0xff]
        %v300 = vld [vmem:[#allocation5 + $0x8] sm:$0xff]
        %303 = vst [vmem:[#allocation1] ss:$2 sm:$0xff] %v297
        %s304 = scalar_lea.vmem [#allocation1], 1
        %305 = vst [vmem:[%s304] ss:$2 sm:$0xff] %v298
        %v306 = vld.sshfl [vmem:[#allocation1] sm:$0xff pattern:$0x75316420]
        %vm307 = vcmask 130048
        %v308 = vsel %vm307, %v306, 0
        %310 = vmatpush.msra.mxu0 0.0
        %311 = vmatpush.msra.mxu0 0.0
        %312 = vmatpush.msra.mxu0 0.0
        %313 = vmatpush.msra.mxu0 0.0
        %314 = vmatpush.msra.mxu0 0.0
        %315 = vmatpush.msra.mxu0 0.0
        %316 = vmatpush.msra.mxu0 0.0
        %317 = vmatpush.msra.mxu0 0.0
        %318 = vmatpush.msra.mxu0 0.0
        %319 = vmatpush.msra.mxu0 0.0
        %320 = vmatpush.msra.mxu0 0.0
        %321 = vmatpush.msra.mxu0 0.0
        %322 = vmatpush.msra.mxu0 0.0
        %323 = vmatpush.msra.mxu0 0.0
        %324 = vmatpush.msra.mxu0 %v300
        %325 = vmatpush.msra.mxu0 %v299
        %326 = vmatmul.f32.gmra.mxu0 %v308
        %v327 = vpop.f32.mrf.mxu0
        %v328 = vadd.f32 0.0, %v327
        %329 = vdwg.mxu0
        %v331 = vrot.slane %v328, 4
        %v333 = vld [vmem:[%s265] sm:$0xf]
        %v334 = vld [vmem:[%s265 + $0x8] sm:$0xf]
        %v335 = vadd.f32 %v328, %v333
        %v336 = vadd.f32 %v331, %v334
        %vm337 = vcmask 257024
        %338 = vst.msk [vmem:[%s293] sm:$0xf] %vm337, %v335
        %339 = vst.msk [vmem:[%s293 + $0x8] sm:$0xf] %vm337, %v336
        %s340 = scalar_lea.vmem [#allocation5], 16
        %v341 = vld [vmem:[%s340] sm:$0xff]
        %v342 = vld [vmem:[%s340 + $0x8] sm:$0xff]
        %343 = vst [vmem:[#allocation1] ss:$2 sm:$0xff] %v297
        %s344 = scalar_lea.vmem [#allocation1], 1
        %345 = vst [vmem:[%s344] ss:$2 sm:$0xff] %v298
        %v346 = vld.sshfl [vmem:[#allocation1] sm:$0xff pattern:$0x75316420]
        %v347 = vsel %vm307, %v346, 0
        %349 = vmatpush.msra.mxu0 0.0
        %350 = vmatpush.msra.mxu0 0.0
        %351 = vmatpush.msra.mxu0 0.0
        %352 = vmatpush.msra.mxu0 0.0
        %353 = vmatpush.msra.mxu0 0.0
        %354 = vmatpush.msra.mxu0 0.0
        %355 = vmatpush.msra.mxu0 0.0
        %356 = vmatpush.msra.mxu0 0.0
        %357 = vmatpush.msra.mxu0 0.0
        %358 = vmatpush.msra.mxu0 0.0
        %359 = vmatpush.msra.mxu0 0.0
        %360 = vmatpush.msra.mxu0 0.0
        %361 = vmatpush.msra.mxu0 0.0
        %362 = vmatpush.msra.mxu0 0.0
        %363 = vmatpush.msra.mxu0 %v342
        %364 = vmatpush.msra.mxu0 %v341
        %365 = vmatmul.f32.gmra.mxu0 %v347
        %v366 = vpop.f32.mrf.mxu0
        %v367 = vadd.f32 0.0, %v366
        %368 = vdwg.mxu0
        %v370 = vrot.slane %v367, 4
        %v372 = vld [vmem:[%s265] sm:$0xf]
        %v373 = vld [vmem:[%s265 + $0x8] sm:$0xf]
        %376 = vrot.lane.b32.xlu0 %v372, 96
        %v377 = vpop.permute.xlu0 %376
        %378 = vrot.lane.b32.xlu0 %v373, 96
        %v379 = vpop.permute.xlu0 %378
        %v382 = vadd.f32 %v367, %v377
        %v383 = vadd.f32 %v370, %v379
        %386 = vst [vmem:[#allocation1] ss:$2 sm:$0xff] %v382
        %v387 = vld.sshfl [vmem:[#allocation1] sm:$0xff pattern:$0x75316420]
        %s388 = scalar_lea.vmem [#allocation1], 16
        %389 = vst [vmem:[%s388] ss:$2 sm:$0xff] %v383
        %v390 = vld.sshfl [vmem:[#allocation1 + $0x10] sm:$0xff pattern:$0x75316420]
        %391 = vrot.lane.b32.xlu0 %v387, 32
        %v392 = vpop.permute.xlu0 %391
        %393 = vrot.lane.b32.xlu0 %v390, 32
        %v394 = vpop.permute.xlu0 %393
        %vm397 = vcmask 519424
        %398 = vst.msk [vmem:[%s293] sm:$0xf] %vm397, %v392
        %399 = vst.msk [vmem:[%s293 + $0x8] sm:$0xf] %vm397, %v394
        %s400 = scalar_lea.vmem [#allocation5], 32
        %v401 = vld [vmem:[%s400] sm:$0xff]
        %v402 = vld [vmem:[%s400 + $0x8] sm:$0xff]
        %403 = vst [vmem:[#allocation1] ss:$2 sm:$0xff] %v297
        %s404 = scalar_lea.vmem [#allocation1], 1
        %405 = vst [vmem:[%s404] ss:$2 sm:$0xff] %v298
        %v406 = vld.sshfl [vmem:[#allocation1] sm:$0xff pattern:$0x75316420]
        %v407 = vsel %vm307, %v406, 0
        %409 = vmatpush.msra.mxu0 0.0
        %410 = vmatpush.msra.mxu0 0.0
        %411 = vmatpush.msra.mxu0 0.0
        %412 = vmatpush.msra.mxu0 0.0
        %413 = vmatpush.msra.mxu0 0.0
        %414 = vmatpush.msra.mxu0 0.0
        %415 = vmatpush.msra.mxu0 0.0
        %416 = vmatpush.msra.mxu0 0.0
        %417 = vmatpush.msra.mxu0 0.0
        %418 = vmatpush.msra.mxu0 0.0
        %419 = vmatpush.msra.mxu0 0.0
        %420 = vmatpush.msra.mxu0 0.0
        %421 = vmatpush.msra.mxu0 0.0
        %422 = vmatpush.msra.mxu0 0.0
        %423 = vmatpush.msra.mxu0 %v402
        %424 = vmatpush.msra.mxu0 %v401
        %425 = vmatmul.f32.gmra.mxu0 %v407
        %v426 = vpop.f32.mrf.mxu0
        %v427 = vadd.f32 0.0, %v426
        %428 = vdwg.mxu0
        %v430 = vrot.slane %v427, 4
        %v432 = vld [vmem:[%s265 + $0x4] sm:$0xf]
        %v433 = vld [vmem:[%s265 + $0xc] sm:$0xf]
        %v434 = vadd.f32 %v427, %v432
        %v435 = vadd.f32 %v430, %v433
        %436 = vst.msk [vmem:[%s293 + $0x4] sm:$0xf] %vm337, %v434
        %437 = vst.msk [vmem:[%s293 + $0xc] sm:$0xf] %vm337, %v435
        %s438 = scalar_lea.vmem [#allocation5], 48
        %v439 = vld [vmem:[%s438] sm:$0xff]
        %v440 = vld [vmem:[%s438 + $0x8] sm:$0xff]
        %441 = vst [vmem:[#allocation1] ss:$2 sm:$0xff] %v297
        %s442 = scalar_lea.vmem [#allocation1], 1
        %443 = vst [vmem:[%s442] ss:$2 sm:$0xff] %v298
        %v444 = vld.sshfl [vmem:[#allocation1] sm:$0xff pattern:$0x75316420]
        %v445 = vsel %vm307, %v444, 0
        %447 = vmatpush.msra.mxu0 0.0
        %448 = vmatpush.msra.mxu0 0.0
        %449 = vmatpush.msra.mxu0 0.0
        %450 = vmatpush.msra.mxu0 0.0
        %451 = vmatpush.msra.mxu0 0.0
        %452 = vmatpush.msra.mxu0 0.0
        %453 = vmatpush.msra.mxu0 0.0
        %454 = vmatpush.msra.mxu0 0.0
        %455 = vmatpush.msra.mxu0 0.0
        %456 = vmatpush.msra.mxu0 0.0
        %457 = vmatpush.msra.mxu0 0.0
        %458 = vmatpush.msra.mxu0 0.0
        %459 = vmatpush.msra.mxu0 0.0
        %460 = vmatpush.msra.mxu0 0.0
        %461 = vmatpush.msra.mxu0 %v440
        %462 = vmatpush.msra.mxu0 %v439
        %463 = vmatmul.f32.gmra.mxu0 %v445
        %v464 = vpop.f32.mrf.mxu0
        %v465 = vadd.f32 0.0, %v464
        %466 = vdwg.mxu0
        %v468 = vrot.slane %v465, 4
        %v470 = vld [vmem:[%s265 + $0x4] sm:$0xf]
        %v471 = vld [vmem:[%s265 + $0xc] sm:$0xf]
        %474 = vrot.lane.b32.xlu0 %v470, 96
        %v475 = vpop.permute.xlu0 %474
        %476 = vrot.lane.b32.xlu0 %v471, 96
        %v477 = vpop.permute.xlu0 %476
        %v480 = vadd.f32 %v465, %v475
        %v481 = vadd.f32 %v468, %v477
        %484 = vst [vmem:[#allocation1] ss:$2 sm:$0xff] %v480
        %v485 = vld.sshfl [vmem:[#allocation1] sm:$0xff pattern:$0x75316420]
        %s486 = scalar_lea.vmem [#allocation1], 16
        %487 = vst [vmem:[%s486] ss:$2 sm:$0xff] %v481
        %v488 = vld.sshfl [vmem:[#allocation1 + $0x10] sm:$0xff pattern:$0x75316420]
        %489 = vrot.lane.b32.xlu0 %v485, 32
        %v490 = vpop.permute.xlu0 %489
        %491 = vrot.lane.b32.xlu0 %v488, 32
        %v492 = vpop.permute.xlu0 %491
        %495 = vst.msk [vmem:[%s293 + $0x4] sm:$0xf] %vm397, %v490
        %496 = vst.msk [vmem:[%s293 + $0xc] sm:$0xf] %vm397, %v492
        %s497 = scalar_lea.vmem [#allocation5], 64
        %v498 = vld [vmem:[%s497] sm:$0xff]
        %v499 = vld [vmem:[%s497 + $0x8] sm:$0xff]
        %500 = vst [vmem:[#allocation1] ss:$2 sm:$0xff] %v297
        %s501 = scalar_lea.vmem [#allocation1], 1
        %502 = vst [vmem:[%s501] ss:$2 sm:$0xff] %v298
        %v503 = vld.sshfl [vmem:[#allocation1] sm:$0xff pattern:$0x75316420]
        %v504 = vsel %vm307, %v503, 0
        %506 = vmatpush.msra.mxu0 0.0
        %507 = vmatpush.msra.mxu0 0.0
        %508 = vmatpush.msra.mxu0 0.0
        %509 = vmatpush.msra.mxu0 0.0
        %510 = vmatpush.msra.mxu0 0.0
        %511 = vmatpush.msra.mxu0 0.0
        %512 = vmatpush.msra.mxu0 0.0
        %513 = vmatpush.msra.mxu0 0.0
        %514 = vmatpush.msra.mxu0 0.0
        %515 = vmatpush.msra.mxu0 0.0
        %516 = vmatpush.msra.mxu0 0.0
        %517 = vmatpush.msra.mxu0 0.0
        %518 = vmatpush.msra.mxu0 0.0
        %519 = vmatpush.msra.mxu0 0.0
        %520 = vmatpush.msra.mxu0 %v499
        %521 = vmatpush.msra.mxu0 %v498
        %522 = vmatmul.f32.gmra.mxu0 %v504
        %v523 = vpop.f32.mrf.mxu0
        %v524 = vadd.f32 0.0, %v523
        %525 = vdwg.mxu0
        %v527 = vrot.slane %v524, 4
        %s529 = scalar_lea.vmem %s265, 16 [#allocation7]
        %v530 = vld [vmem:[%s529] sm:$0xf]
        %v531 = vld [vmem:[%s529 + $0x8] sm:$0xf]
        %v532 = vadd.f32 %v524, %v530
        %v533 = vadd.f32 %v527, %v531
        %s534 = scalar_lea.vmem %s293, 16 [#allocation8]
        %535 = vst.msk [vmem:[%s534] sm:$0xf] %vm337, %v532
        %536 = vst.msk [vmem:[%s534 + $0x8] sm:$0xf] %vm337, %v533
        %s537 = scalar_lea.vmem [#allocation5], 80
        %v538 = vld [vmem:[%s537] sm:$0xff]
        %v539 = vld [vmem:[%s537 + $0x8] sm:$0xff]
        %540 = vst [vmem:[#allocation1] ss:$2 sm:$0xff] %v297
        %s541 = scalar_lea.vmem [#allocation1], 1
        %542 = vst [vmem:[%s541] ss:$2 sm:$0xff] %v298
        %v543 = vld.sshfl [vmem:[#allocation1] sm:$0xff pattern:$0x75316420]
        %v544 = vsel %vm307, %v543, 0
        %546 = vmatpush.msra.mxu0 0.0
        %547 = vmatpush.msra.mxu0 0.0
        %548 = vmatpush.msra.mxu0 0.0
        %549 = vmatpush.msra.mxu0 0.0
        %550 = vmatpush.msra.mxu0 0.0
        %551 = vmatpush.msra.mxu0 0.0
        %552 = vmatpush.msra.mxu0 0.0
        %553 = vmatpush.msra.mxu0 0.0
        %554 = vmatpush.msra.mxu0 0.0
        %555 = vmatpush.msra.mxu0 0.0
        %556 = vmatpush.msra.mxu0 0.0
        %557 = vmatpush.msra.mxu0 0.0
        %558 = vmatpush.msra.mxu0 0.0
        %559 = vmatpush.msra.mxu0 0.0
        %560 = vmatpush.msra.mxu0 %v539
        %561 = vmatpush.msra.mxu0 %v538
        %562 = vmatmul.f32.gmra.mxu0 %v544
        %v563 = vpop.f32.mrf.mxu0
        %v564 = vadd.f32 0.0, %v563
        %565 = vdwg.mxu0
        %v567 = vrot.slane %v564, 4
        %v569 = vld [vmem:[%s529] sm:$0xf]
        %v570 = vld [vmem:[%s529 + $0x8] sm:$0xf]
        %573 = vrot.lane.b32.xlu0 %v569, 96
        %v574 = vpop.permute.xlu0 %573
        %575 = vrot.lane.b32.xlu0 %v570, 96
        %v576 = vpop.permute.xlu0 %575
        %v579 = vadd.f32 %v564, %v574
        %v580 = vadd.f32 %v567, %v576
        %583 = vst [vmem:[#allocation1] ss:$2 sm:$0xff] %v579
        %v584 = vld.sshfl [vmem:[#allocation1] sm:$0xff pattern:$0x75316420]
        %s585 = scalar_lea.vmem [#allocation1], 16
        %586 = vst [vmem:[%s585] ss:$2 sm:$0xff] %v580
        %v587 = vld.sshfl [vmem:[#allocation1 + $0x10] sm:$0xff pattern:$0x75316420]
        %588 = vrot.lane.b32.xlu0 %v584, 32
        %v589 = vpop.permute.xlu0 %588
        %590 = vrot.lane.b32.xlu0 %v587, 32
        %v591 = vpop.permute.xlu0 %590
        %594 = vst.msk [vmem:[%s534] sm:$0xf] %vm397, %v589
        %595 = vst.msk [vmem:[%s534 + $0x8] sm:$0xf] %vm397, %v591
        %s596 = scalar_lea.vmem [#allocation5], 96
        %v597 = vld [vmem:[%s596] sm:$0xff]
        %v598 = vld [vmem:[%s596 + $0x8] sm:$0xff]
        %599 = vst [vmem:[#allocation1] ss:$2 sm:$0xff] %v297
        %s600 = scalar_lea.vmem [#allocation1], 1
        %601 = vst [vmem:[%s600] ss:$2 sm:$0xff] %v298
        %v602 = vld.sshfl [vmem:[#allocation1] sm:$0xff pattern:$0x75316420]
        %v603 = vsel %vm307, %v602, 0
        %605 = vmatpush.msra.mxu0 0.0
        %606 = vmatpush.msra.mxu0 0.0
        %607 = vmatpush.msra.mxu0 0.0
        %608 = vmatpush.msra.mxu0 0.0
        %609 = vmatpush.msra.mxu0 0.0
        %610 = vmatpush.msra.mxu0 0.0
        %611 = vmatpush.msra.mxu0 0.0
        %612 = vmatpush.msra.mxu0 0.0
        %613 = vmatpush.msra.mxu0 0.0
        %614 = vmatpush.msra.mxu0 0.0
        %615 = vmatpush.msra.mxu0 0.0
        %616 = vmatpush.msra.mxu0 0.0
        %617 = vmatpush.msra.mxu0 0.0
        %618 = vmatpush.msra.mxu0 0.0
        %619 = vmatpush.msra.mxu0 %v598
        %620 = vmatpush.msra.mxu0 %v597
        %621 = vmatmul.f32.gmra.mxu0 %v603
        %v622 = vpop.f32.mrf.mxu0
        %v623 = vadd.f32 0.0, %v622
        %624 = vdwg.mxu0
        %v626 = vrot.slane %v623, 4
        %v628 = vld [vmem:[%s529 + $0x4] sm:$0xf]
        %v629 = vld [vmem:[%s529 + $0xc] sm:$0xf]
        %v630 = vadd.f32 %v623, %v628
        %v631 = vadd.f32 %v626, %v629
        %632 = vst.msk [vmem:[%s534 + $0x4] sm:$0xf] %vm337, %v630
        %633 = vst.msk [vmem:[%s534 + $0xc] sm:$0xf] %vm337, %v631
        %s634 = scalar_lea.vmem [#allocation5], 112
        %v635 = vld [vmem:[%s634] sm:$0xff]
        %v636 = vld [vmem:[%s634 + $0x8] sm:$0xff]
        %637 = vst [vmem:[#allocation1] ss:$2 sm:$0xff] %v297
        %s638 = scalar_lea.vmem [#allocation1], 1
        %639 = vst [vmem:[%s638] ss:$2 sm:$0xff] %v298
        %v640 = vld.sshfl [vmem:[#allocation1] sm:$0xff pattern:$0x75316420]
        %v641 = vsel %vm307, %v640, 0
        %643 = vmatpush.msra.mxu0 0.0
        %644 = vmatpush.msra.mxu0 0.0
        %645 = vmatpush.msra.mxu0 0.0
        %646 = vmatpush.msra.mxu0 0.0
        %647 = vmatpush.msra.mxu0 0.0
        %648 = vmatpush.msra.mxu0 0.0
        %649 = vmatpush.msra.mxu0 0.0
        %650 = vmatpush.msra.mxu0 0.0
        %651 = vmatpush.msra.mxu0 0.0
        %652 = vmatpush.msra.mxu0 0.0
        %653 = vmatpush.msra.mxu0 0.0
        %654 = vmatpush.msra.mxu0 0.0
        %655 = vmatpush.msra.mxu0 0.0
        %656 = vmatpush.msra.mxu0 0.0
        %657 = vmatpush.msra.mxu0 %v636
        %658 = vmatpush.msra.mxu0 %v635
        %659 = vmatmul.f32.gmra.mxu0 %v641
        %v660 = vpop.f32.mrf.mxu0
        %v661 = vadd.f32 0.0, %v660
        %662 = vdwg.mxu0
        %v664 = vrot.slane %v661, 4
        %v666 = vld [vmem:[%s529 + $0x4] sm:$0xf]
        %v667 = vld [vmem:[%s529 + $0xc] sm:$0xf]
        %670 = vrot.lane.b32.xlu0 %v666, 96
        %v671 = vpop.permute.xlu0 %670
        %672 = vrot.lane.b32.xlu0 %v667, 96
        %v673 = vpop.permute.xlu0 %672
        %v676 = vadd.f32 %v661, %v671
        %v677 = vadd.f32 %v664, %v673
        %680 = vst [vmem:[#allocation1] ss:$2 sm:$0xff] %v676
        %v681 = vld.sshfl [vmem:[#allocation1] sm:$0xff pattern:$0x75316420]
        %s682 = scalar_lea.vmem [#allocation1], 16
        %683 = vst [vmem:[%s682] ss:$2 sm:$0xff] %v677
        %v684 = vld.sshfl [vmem:[#allocation1 + $0x10] sm:$0xff pattern:$0x75316420]
        %685 = vrot.lane.b32.xlu0 %v681, 32
        %v686 = vpop.permute.xlu0 %685
        %687 = vrot.lane.b32.xlu0 %v684, 32
        %v688 = vpop.permute.xlu0 %687
        %691 = vst.msk [vmem:[%s534 + $0x4] sm:$0xf] %vm397, %v686
        %692 = vst.msk [vmem:[%s534 + $0xc] sm:$0xf] %vm397, %v688
        %s693 = sand.u32 %s120, 1
        %s694 = scalar_lea.sflag [#allocation4], %s693
        %s695 = sand.u32 %s120, 1
        %s696 = smul.addr %s695, 32
        %s697 = scalar_lea.vmem [#allocation8], %s696
        // Predicated region
        $region45: #{tpu_custom_call.1} parent=31 // pred_check
          %p698 = pneg %p130
        $region46: #{tpu_custom_call.1} parent=31 // pred_check_branch
          %700 = sbr.rel (%p698) target = $region48
        $region47: #{tpu_custom_call.1} parent=31 // pred_region
          #allocation12 [shape = 'u32[6]{0}', space=smem, size = 0x18, scoped, tag = 'DMA stride descriptor']
          %s701 = smul.u32 2, %s26
          %703 = vsyncadd %s694, 0
          %s704 = smul.addr %s25, 8
          %s705 = sadd.s32 %s701, %s704
          %s706 = smul.addr %s705, 8
          %s707 = scalar_lea.hbm %s3, %s706
          %s709 = sshll.u32 1, 14
          %s710 = sxor.u32 4294967295, %s709
          %s713 = sshll.u32 7, 18
          %s714 = sxor.u32 4294967295, %s713
          %s715 = sand.u32 0, %s714
          %s717 = sor.u32 %s715, 0
          %s718 = sshll.u32 %s697, 4
          %s719 = int_to_ptr.vmem [resolvable:$true] %s718
          %s720 = sshll.u32 %s707, 4
          %s721 = int_to_ptr.hbm [resolvable:$true] %s720
          %727 = sst [smem:[#allocation12]] 256
          %s728 = scalar_lea.smem [#allocation12], 1
          %729 = sst [smem:[%s728]] 512
          %s730 = scalar_lea.smem [#allocation12], 2
          %731 = sst [smem:[%s730]] 2
          %s732 = scalar_lea.smem [#allocation12], 3
          %733 = sst [smem:[%s732]] 128
          %s734 = scalar_lea.smem [#allocation12], 4
          %735 = sst [smem:[%s734]] 128
          %s736 = scalar_lea.smem [#allocation12], 5
          %737 = sst [smem:[%s736]] 8
          %739 = dma.general %s719, 512, %s721, %s694, [#allocation11], [#allocation12], %s717, 0
        $region48: #{tpu_custom_call.1} parent=31 // pred_fallthru
          _
      $region32: #{tpu_custom_call.1} parent=5 // pred_fallthru
        _
      %p740 = scmp.le.s32.totalorder 2, %s16
      // Predicated region
      $region49: #{tpu_custom_call.1} parent=5 // pred_check
        %p741 = pneg %p740
      $region50: #{tpu_custom_call.1} parent=5 // pred_check_branch
        %743 = sbr.rel (%p741) target = $region52
      $region51: #{tpu_custom_call.1} parent=5 // pred_region
        %s744 = ssub.s32 %s16, 2
        // Predicated region
        $region53: #{tpu_custom_call.1} parent=51 // pred_check
          %p745 = pneg %p136
        $region54: #{tpu_custom_call.1} parent=51 // pred_check_branch
          %747 = sbr.rel (%p745) target = $region56
        $region55: #{tpu_custom_call.1} parent=51 // pred_region
          %s748 = sand.u32 %s121, 1
          %s749 = scalar_lea.sflag [#allocation4], %s748
          %s750 = sand.u32 %s121, 1
          %s751 = smul.addr %s750, 32
          %s752 = scalar_lea.vmem [#allocation8], %s751
          %754 = dma.done %s749, 512
        $region56: #{tpu_custom_call.1} parent=51 // pred_fallthru
          _
      $region52: #{tpu_custom_call.1} parent=5 // pred_fallthru
        _
    $region6: #{tpu_custom_call.1} parent=1 // loop_footer
      %s20 = sadd.s32 1, %s16
    $region7: #{tpu_custom_call.1} parent=1 // loop_footer_branch
      %15 = sbr.rel target = $region3
    $region8: #{tpu_custom_call.1} parent=1 // loop_exit
      _
    %755 = vsyncpa [#allocation3], 1
    %s756 = scalar_lea.sflag [#allocation3], 1
    %757 = vsyncpa %s756, 1
    %758 = vsyncpa [#allocation6], 1
    %759 = vsyncpa [#allocation4], 1
    %s760 = scalar_lea.sflag [#allocation4], 1
    %761 = vsyncpa %s760, 1

</llo_original>
